<compile_context>
chip_gen: v7x
topology: tpu7x:2x2x1
jax: 0.10.0
libtpu: 0.0.40
codegen_flags: <defaults>
</compile_context>

<pallas_src>
from functools import partial

import jax
import jax.numpy as jnp
from jax.experimental import pallas as pl
from jax.experimental.pallas import tpu as pltpu


def rnd_loss_kernel(t_ref, x_ref, wa_ref, wb_ref, tgt_ref,      # inputs
                    psse_ref, w_new_ref,                         # outputs
                    z_acc_ref,                                   # scratch
                    *, tdin):
    k = pl.program_id(1)            # D_IN tile index (reduction axis, innermost)
    nk = pl.num_programs(1)

    t = t_ref[0]                    # scalar mixing coefficient from SMEM

    # zero the per-output-tile matmul accumulator at the start of each K sweep
    @pl.when(k == 0)
    def _():
        z_acc_ref[...] = jnp.zeros_like(z_acc_ref)

    # parameter interpolation (FMA form):  p_b <- p_b + t*(p_a - p_b)
    wb = wb_ref[...]
    w = wb + t * (wa_ref[...] - wb)
    w_new_ref[...] = w              # written back in place of wb (aliased)

    # modelb forward partial: z[:, j-tile] += x[:, k-chunk] @ W[k-tile, j-tile]
    # x is fully resident; slice the current K chunk (start is tile-aligned).
    start = pl.multiple_of(k * tdin, tdin)
    xk = x_ref[:, pl.ds(start, tdin)]
    z_acc_ref[...] += jnp.dot(xk, w, preferred_element_type=jnp.float32)

    # end of the K sweep for this output tile: emit this tile's squared error
    # (bias already folded into the target by the wrapper)
    @pl.when(k == nk - 1)
    def _():
        diff = z_acc_ref[...] - tgt_ref[...]
        sse = jnp.sum(diff * diff)
        psse_ref[...] = jnp.broadcast_to(sse, psse_ref.shape)


def rnd_loss(t, x, wa, wb, ba, bb, target, *, tdin=1024, tdout=1024):
    """Returns (loss, new_wb, new_bb). Mirrors RndLoss.forward with a Linear modelb.

    Layout: x (B, D_IN), W (D_IN, D_OUT) (transposed vs nn.Linear), b (1, D_OUT),
    target (B, D_OUT).  wb is updated "in place" via input/output aliasing.
    """
    B, din = x.shape
    din_w, dout = wa.shape
    assert din == din_w and wb.shape == (din, dout)
    assert target.shape == (B, dout)

    tdin = min(tdin, din)
    tdout = min(tdout, dout)
    assert din % tdin == 0 and dout % tdout == 0
    # (8, 128) tiling rule: tile dims must be lane-aligned or the full dimension.
    assert (tdin % 128 == 0) or (tdin == din)
    assert (tdout % 128 == 0) or (tdout == dout)

    # Tiny (1, D_OUT) bias: interpolate outside the kernel and fold into target.
    tt = t[0]
    b_new = bb + tt * (ba - bb)
    tgt_adj = target - b_new        # MSE(xW + b, y) == MSE(xW, y - b)

    n_j = dout // tdout
    n_k = din // tdin

    # Scoped-VMEM budget: 3 weight streams x 2 buffers + resident x + target +
    # z accumulator + partial-SSE block, plus headroom.  ~40 MiB at the default
    # 1024x1024 tiles -- fits v7x's 64 MiB VMEM and is above the 16/32 MiB
    # default scoped limits on v5e/v6e.
    vmem_needed = 4 * (3 * 2 * tdin * tdout       # wa / wb / w_new, double-buffered
                       + B * din                  # resident x
                       + 3 * B * tdout            # target (x2 buffers) + z_acc
                       + 2 * 8 * 128)             # partial-SSE block
    vmem_limit_bytes = int(min(max(vmem_needed + (16 << 20), 32 << 20), 48 << 20))

    grid_spec = pltpu.PrefetchScalarGridSpec(
        num_scalar_prefetch=0,
        grid=(n_j, n_k),
        in_specs=[
            pl.BlockSpec(memory_space=pltpu.MemorySpace.SMEM),      # t (scalar)
            pl.BlockSpec((B, din), lambda j, k: (0, 0)),            # x (fully resident)
            pl.BlockSpec((tdin, tdout), lambda j, k: (k, j)),       # wa
            pl.BlockSpec((tdin, tdout), lambda j, k: (k, j)),       # wb
            pl.BlockSpec((B, tdout), lambda j, k: (0, j)),          # target - b_new
        ],
        out_specs=(
            pl.BlockSpec((1, 8, 128), lambda j, k: (j, 0, 0)),      # per-j SSE partials
            pl.BlockSpec((tdin, tdout), lambda j, k: (k, j)),       # interpolated W
        ),
        scratch_shapes=[
            pltpu.VMEM((B, tdout), jnp.float32),                    # z accumulator
        ],
    )

    kernel = partial(rnd_loss_kernel, tdin=tdin)

    psse, w_new = pl.pallas_call(
        kernel,
        out_shape=(
            jax.ShapeDtypeStruct((n_j, 8, 128), jnp.float32),       # partial SSE per j
            jax.ShapeDtypeStruct((din, dout), jnp.float32),         # new W of modelb
        ),
        grid_spec=grid_spec,
        # wb (input 3) -> w_new (output 1): in-place parameter update, no extra
        # HBM.  Safe only because each (k, j) tile is read+written in one step
        # and visited exactly once.
        input_output_aliases={3: 1},
        compiler_params=pltpu.CompilerParams(
            # Per-j partial SSE outputs -> no cross-grid accumulator -> the
            # D_OUT axis can be split across TensorCores (v7x megacore).  The
            # K axis carries the z accumulator, hence "arbitrary".
            dimension_semantics=("parallel", "arbitrary"),
            vmem_limit_bytes=vmem_limit_bytes,
        ),
        cost_estimate=pl.CostEstimate(
            flops=2 * B * din * dout + 3 * din * dout,              # matmul + interp
            transcendentals=0,
            bytes_accessed=(3 * din * dout + B * din + 2 * B * dout) * 4,
        ),
    )(t, x, wa, wb, tgt_adj)

    # Final mean over the *global* element count (each partial block carries one
    # scalar per j tile, broadcast over its (8, 128) lane pad).
    loss = jnp.sum(psse[:, 0, 0]) * (1.0 / float(B * dout))
    return loss, w_new, b_new


if __name__ == "__main__":
    key = jax.random.PRNGKey(0)
    k_t, k_x, k_wa, k_wb, k_ba, k_bb, k_tgt = jax.random.split(key, 7)

    B, D_IN, D_OUT = 8, 256, 256

    # random_l = torch.rand((1,)) -> deterministic uniform scalar
    t = jax.random.uniform(k_t, (1,), dtype=jnp.float32)

    x = jax.random.normal(k_x, (B, D_IN), dtype=jnp.float32)
    wa = jax.random.normal(k_wa, (D_IN, D_OUT), dtype=jnp.float32) * 0.05
    wb = jax.random.normal(k_wb, (D_IN, D_OUT), dtype=jnp.float32) * 0.05
    ba = jax.random.normal(k_ba, (1, D_OUT), dtype=jnp.float32) * 0.05
    bb = jax.random.normal(k_bb, (1, D_OUT), dtype=jnp.float32) * 0.05
    target = jax.random.normal(k_tgt, (B, D_OUT), dtype=jnp.float32)

    # Pure-JAX reference, computed BEFORE the kernel (wb may be aliased/donated).
    tt = t[0]
    w_ref = wb + tt * (wa - wb)
    b_ref = bb + tt * (ba - bb)
    loss_ref_val = jnp.mean((x @ w_ref + b_ref - target) ** 2)
    jax.block_until_ready((w_ref, b_ref, loss_ref_val))

    # 128x128 tiles -> a 2x2 grid, exercising the pipelined tiling, the K
    # reduction, resident-x slicing, and the per-j partial-SSE path.
    loss, w_new, b_new = rnd_loss(t, x, wa, wb, ba, bb, target, tdin=128, tdout=128)
    jax.block_until_ready((loss, w_new, b_new))

    assert jnp.allclose(w_new, w_ref, rtol=1e-6, atol=1e-6)
    assert jnp.allclose(b_new, b_ref, rtol=1e-6, atol=1e-6)
    assert jnp.allclose(loss, loss_ref_val, rtol=1e-3, atol=1e-5), (loss, loss_ref_val)

    print("KERNEL_OK")
</pallas_src>

<mosaic_0001>
module attributes {stable_mosaic.version = 11 : i64} {
  func.func @rnd_loss_kernel(%arg0: i32, %arg1: i32, %arg2: memref<1xf32, #tpu.memory_space<smem>>, %arg3: memref<8x256xf32, #tpu.memory_space<vmem>>, %arg4: memref<128x128xf32, #tpu.memory_space<vmem>>, %arg5: memref<128x128xf32, #tpu.memory_space<vmem>>, %arg6: memref<8x128xf32, #tpu.memory_space<vmem>>, %arg7: memref<1x8x128xf32, #tpu.memory_space<vmem>>, %arg8: memref<128x128xf32, #tpu.memory_space<vmem>>, %arg9: memref<8x128xf32, #tpu.memory_space<vmem>>) attributes {dimension_semantics = [#tpu.dimension_semantics<parallel>, #tpu.dimension_semantics<arbitrary>], iteration_bounds = array<i64: 2, 2>, scalar_prefetch = 0 : i64, scratch_operands = 1 : i64, tpu.core_type = #tpu.core_type<tc>, window_params = [{transform_indices = @transform_0, window_bounds = array<i64: 1>}, {pipeline_mode = #tpu.pipeline_mode<synchronous>, transform_indices = @transform_1, window_bounds = array<i64: 8, 256>}, {transform_indices = @transform_2, window_bounds = array<i64: 128, 128>}, {transform_indices = @transform_3, window_bounds = array<i64: 128, 128>}, {transform_indices = @transform_4, window_bounds = array<i64: 8, 128>}, {transform_indices = @transform_5, window_bounds = array<i64: 1, 8, 128>}, {transform_indices = @transform_6, window_bounds = array<i64: 128, 128>}]} {
    %c0 = arith.constant 0 : index
    %0 = memref.load %arg2[%c0] : memref<1xf32, #tpu.memory_space<smem>>
    %c0_i32 = arith.constant 0 : i32
    %1 = arith.cmpi eq, %arg1, %c0_i32 : i32
    %2 = arith.extui %1 : i1 to i32
    %c0_i32_0 = arith.constant 0 : i32
    %3 = arith.cmpi ne, %2, %c0_i32_0 : i32
    scf.if %3 {
      %cst_13 = arith.constant 0.000000e+00 : f32
      %22 = vector.broadcast %cst_13 : f32 to vector<8x128xf32>
      %c0_14 = arith.constant 0 : index
      %c0_15 = arith.constant 0 : index
      %23 = vector.load %arg9[%c0_14, %c0_15] : memref<8x128xf32, #tpu.memory_space<vmem>>, vector<8x128xf32>
      tpu.vector_store %arg9[%c0_14, %c0_15], %22 {strides = array<i32>} : memref<8x128xf32, #tpu.memory_space<vmem>>, vector<8x128xf32>,
    } else {
    }
    %c0_1 = arith.constant 0 : index
    %c0_2 = arith.constant 0 : index
    %4 = vector.load %arg5[%c0_1, %c0_2] : memref<128x128xf32, #tpu.memory_space<vmem>>, vector<128x128xf32>
    %c0_3 = arith.constant 0 : index
    %c0_4 = arith.constant 0 : index
    %5 = vector.load %arg4[%c0_3, %c0_4] : memref<128x128xf32, #tpu.memory_space<vmem>>, vector<128x128xf32>
    %6 = arith.subf %5, %4 : vector<128x128xf32>
    %7 = vector.broadcast %0 : f32 to vector<128x128xf32>
    %8 = arith.mulf %7, %6 : vector<128x128xf32>
    %9 = arith.addf %4, %8 : vector<128x128xf32>
    %c0_5 = arith.constant 0 : index
    %c0_6 = arith.constant 0 : index
    %10 = vector.load %arg8[%c0_5, %c0_6] : memref<128x128xf32, #tpu.memory_space<vmem>>, vector<128x128xf32>
    tpu.vector_store %arg8[%c0_5, %c0_6], %9 {strides = array<i32>} : memref<128x128xf32, #tpu.memory_space<vmem>>, vector<128x128xf32>,
    %c128_i32 = arith.constant 128 : i32
    %11 = arith.muli %arg1, %c128_i32 : i32
    %12 = tpu.assume_multiple %11, 128 : i32
    %c0_7 = arith.constant 0 : index
    %13 = arith.index_cast %12 : i32 to index
    %14 = vector.load %arg3[%c0_7, %13] : memref<8x256xf32, #tpu.memory_space<vmem>>, vector<8x128xf32>
    %c0_8 = arith.constant 0 : index
    %c0_9 = arith.constant 0 : index
    %15 = vector.load %arg9[%c0_8, %c0_9] : memref<8x128xf32, #tpu.memory_space<vmem>>, vector<8x128xf32>
    %cst = arith.constant dense<0.000000e+00> : vector<8x128xf32>
    %16 = tpu.matmul %14, %9, %cst {dimension_numbers = #tpu.dot_dimension_numbers<[1], [0], [0], [1], [0, 0, 1, 1], [], []>} : vector<8x128xf32>, vector<128x128xf32>, vector<8x128xf32> -> vector<8x128xf32>
    %17 = arith.addf %15, %16 : vector<8x128xf32>
    %c0_10 = arith.constant 0 : index
    %c0_11 = arith.constant 0 : index
    %18 = vector.load %arg9[%c0_10, %c0_11] : memref<8x128xf32, #tpu.memory_space<vmem>>, vector<8x128xf32>
    tpu.vector_store %arg9[%c0_10, %c0_11], %17 {strides = array<i32>} : memref<8x128xf32, #tpu.memory_space<vmem>>, vector<8x128xf32>,
    %c1_i32 = arith.constant 1 : i32
    %19 = arith.cmpi eq, %arg1, %c1_i32 : i32
    %20 = arith.extui %19 : i1 to i32
    %c0_i32_12 = arith.constant 0 : i32
    %21 = arith.cmpi ne, %20, %c0_i32_12 : i32
    scf.if %21 {
      %c0_13 = arith.constant 0 : index
      %c0_14 = arith.constant 0 : index
      %22 = vector.load %arg9[%c0_13, %c0_14] : memref<8x128xf32, #tpu.memory_space<vmem>>, vector<8x128xf32>
      %c0_15 = arith.constant 0 : index
      %c0_16 = arith.constant 0 : index
      %23 = vector.load %arg6[%c0_15, %c0_16] : memref<8x128xf32, #tpu.memory_space<vmem>>, vector<8x128xf32>
      %24 = arith.subf %22, %23 : vector<8x128xf32>
      %25 = arith.mulf %24, %24 : vector<8x128xf32>
      %26 = vector.shape_cast %25 : vector<8x128xf32> to vector<1x8x128xf32>
      %cst_17 = arith.constant dense<0.000000e+00> : vector<1xf32>
      %27 = vector.multi_reduction <add>, %26, %cst_17 [1, 2] : vector<1x8x128xf32> to vector<1xf32>
      %28 = vector.shape_cast %27 : vector<1xf32> to vector<1x1x1xf32>
      %29 = vector.extract %28[0, 0, 0] : f32 from vector<1x1x1xf32>
      %30 = vector.broadcast %29 : f32 to vector<1x8x128xf32>
      %c0_18 = arith.constant 0 : index
      %c0_19 = arith.constant 0 : index
      %c0_20 = arith.constant 0 : index
      %31 = vector.load %arg7[%c0_18, %c0_19, %c0_20] : memref<1x8x128xf32, #tpu.memory_space<vmem>>, vector<1x8x128xf32>
      tpu.vector_store %arg7[%c0_18, %c0_19, %c0_20], %30 {strides = array<i32>} : memref<1x8x128xf32, #tpu.memory_space<vmem>>, vector<1x8x128xf32>,
    } else {
    }
    return
  }
  func.func @transform_0(%arg0: i32, %arg1: i32) -> i32 {
    %c0_i32 = arith.constant 0 : i32
    %c0_i32_0 = arith.constant 0 : i32
    return %c0_i32 : i32
  }
  func.func @transform_1(%arg0: i32, %arg1: i32) -> (i32, i32) {
    %c0_i32 = arith.constant 0 : i32
    %c0_i32_0 = arith.constant 0 : i32
    %c0_i32_1 = arith.constant 0 : i32
    return %c0_i32, %c0_i32_0 : i32, i32
  }
  func.func @transform_2(%arg0: i32, %arg1: i32) -> (i32, i32) {
    %c0_i32 = arith.constant 0 : i32
    return %arg1, %arg0 : i32, i32
  }
  func.func @transform_3(%arg0: i32, %arg1: i32) -> (i32, i32) {
    %c0_i32 = arith.constant 0 : i32
    return %arg1, %arg0 : i32, i32
  }
  func.func @transform_4(%arg0: i32, %arg1: i32) -> (i32, i32) {
    %c0_i32 = arith.constant 0 : i32
    %c0_i32_0 = arith.constant 0 : i32
    return %c0_i32, %arg0 : i32, i32
  }
  func.func @transform_5(%arg0: i32, %arg1: i32) -> (i32, i32, i32) {
    %c0_i32 = arith.constant 0 : i32
    %c0_i32_0 = arith.constant 0 : i32
    %c0_i32_1 = arith.constant 0 : i32
    return %arg0, %c0_i32, %c0_i32_0 : i32, i32, i32
  }
  func.func @transform_6(%arg0: i32, %arg1: i32) -> (i32, i32) {
    %c0_i32 = arith.constant 0 : i32
    return %arg1, %arg0 : i32, i32
  }
}

</mosaic_0001>

<llo_original>
// kernel: tpu_custom_call.1
$region0: #{tpu_custom_call.1}
  #allocation0 [shape = 'u32[]', space=smem, size = 0x4, offset = 0x4, fixed_abs, tag = 'smem constant byte address 0x4 - core index']
  #allocation1 [shape = 'u32[144,128]{1,0:T(1,128)}', space=vmem, size = 0x12000, scoped, tag = 'internal scratch']
  #allocation2 [shape = 'f32[8,128]{1,0:T(8,128)}', space=vmem, size = 0x1000, scoped, tag = 'scratch operand']
  #allocation3 [shape = 'f32[1]{0:T(128)S(6)}', space=smem, size = 0x200, scoped, tag = 'scoped memory for tpu_custom_call.1']
  %s0 = inlined_call_operand.<no memory space> [shape: f32[1], index: 0, kind: input, shape index: {}]
  %s1 = inlined_call_operand.vmem [shape: f32[8,256], index: 1, kind: input, shape index: {}]
  %s2 = inlined_call_operand.vmem [shape: f32[256,256], index: 2, kind: input, shape index: {}]
  %s3 = inlined_call_operand.hbm [shape: f32[256,256], index: 3, kind: input, shape index: {}, may-alias: {3,6}]
  %s4 = inlined_call_operand.vmem [shape: f32[8,256], index: 4, kind: input, shape index: {}]
  %s5 = inlined_call_operand.hbm [shape: f32[2,8,128], index: 5, kind: output, shape index: {0}]
  %s6 = inlined_call_operand.hbm [shape: f32[256,256], index: 6, kind: output, shape index: {1}, may-alias: {3,6}]
  %7 = xla_tuple %s5, %s6
  %s8 = sld [smem:[#allocation0]]
  $region111: #{tpu_custom_call.1} parent=0
    _
  %s10 = ssub.s32 1, %s8
  %s11 = scalar_select 0, %s10, %s8
  %12 = sst [smem:[#allocation3]] %s0
  $region1: #{tpu_custom_call.1} parent=0
    #allocation4 [shape = 'u8[131072]{0}', space=vmem, size = 0x20000, scoped, tag = 'input window, operand 2']
    #allocation5 [shape = 'u8[131072]{0}', space=vmem, size = 0x20000, scoped, tag = 'input window, operand 3']
    #allocation6 [shape = 's32[2]{0}', space=sflag, size = 0x8, scoped, tag = 'scoped memory for tpu_custom_call.1']
    #allocation7 [shape = 's32[2]{0}', space=sflag, size = 0x8, scoped, tag = 'scoped memory for tpu_custom_call.1']
    #allocation8 [shape = 'u8[8192]{0}', space=vmem, size = 0x2000, scoped, tag = 'output window, operand 0']
    #allocation9 [shape = 'u8[131072]{0}', space=vmem, size = 0x20000, scoped, tag = 'output window, operand 1']
    #allocation10 [shape = 's32[2]{0}', space=sflag, size = 0x8, scoped, tag = 'scoped memory for tpu_custom_call.1']
    %13 = vsyncpa [#allocation6], 0
    %s14 = scalar_lea.sflag [#allocation6], 1
    %15 = vsyncpa %s14, 0
    %16 = vsyncpa [#allocation7], 0
    %s17 = scalar_lea.sflag [#allocation7], 1
    %18 = vsyncpa %s17, 0
    %19 = vsyncpa [#allocation10], 0
    %s20 = scalar_lea.sflag [#allocation10], 1
    %21 = vsyncpa %s20, 0
    loop: start=0, step=1, limit=6
    $region2: #{tpu_custom_call.1} parent=1 // loop_pre_header
      _
    $region3: #{tpu_custom_call.1} parent=1 // loop_header
      %s23 = sphi 0, %s27
      %p24 = scmp.ge.s32.totalorder %s23, 6
      %s30 = sphi 0, %s42
      %s31 = sphi 0, %s38
      %s32 = sphi 0, %s30
      %s33 = sphi 0, %s31
      %s34 = sphi 0, %s32
      %s35 = sphi 0, %s33
      %s43 = sphi 0, %s43
      %s45 = sphi 0, %s43
      %s46 = sphi 0, %s45
      %s60 = sphi 0, %s46
      %s64 = sphi 0, %s64
      %s66 = sphi 0, %s64
      %s67 = sphi 0, %s66
      %s81 = sphi 0, %s67
      %s89 = sphi 0, %s91
      %s92 = sphi 0, %s89
      %s93 = sphi 0, %s92
      %s109 = sphi 0, %s93
      %s117 = sphi 0, %s119
      %s120 = sphi 0, %s117
      %s121 = sphi 0, %s120
      %s137 = sphi 0, %s121
      %s143 = sphi 0, %s145
      %s146 = sphi 0, %s143
      %s147 = sphi 0, %s146
      %s163 = sphi 0, %s147
      %s169 = sphi 0, %s171
      %s172 = sphi 0, %s169
      %s173 = sphi 0, %s172
      %s189 = sphi 0, %s173
      %s197 = sphi 0, %s199
      %s200 = sphi 0, %s197
      %s201 = sphi 0, %s200
      %s217 = sphi 0, %s201
    $region4: #{tpu_custom_call.1} parent=1 // loop_header_branch
      %26 = sbr.rel (%p24) target = $region8
    $region5: #{tpu_custom_call.1} parent=1 // loop_body
      %s28 = ssub.s32 %s23, 1
      %s29 = ssub.s32 %s23, 2
      %s36 = sadd.s32 1, %s31
      %p37 = scmp.ge.s32.totalorder %s36, 2
      %s38 = scalar_select %p37, 0, %s36
      %s39 = sadd.s32 1, %s30
      %s40 = scalar_select %p37, %s39, %s30
      %p41 = scmp.ge.s32.totalorder %s40, 2
      %s42 = scalar_select %p41, 0, %s40
      %s44 = sadd.s32 %s43, 1
      %p47 = scmp.eq.s32.totalorder %s23, 3
      %p48 = scmp.ne.s32.totalorder %s43, %s45
      %p49 = scmp.eq.s32.totalorder %s23, 0
      %p50 = por %p48, %p49
      %p51 = scmp.ne.s32.totalorder %s43, %s45
      %p52 = scmp.eq.s32.totalorder %s28, 3
      %p53 = por %p51, %p52
      %p54 = scmp.ne.s32.totalorder %s45, %s46
      %p55 = scmp.eq.s32.totalorder %s28, 0
      %p56 = por %p54, %p55
      %p57 = scmp.ne.s32.totalorder %s45, %s46
      %p58 = scmp.eq.s32.totalorder %s29, 3
      %p59 = por %p57, %p58
      %p61 = scmp.ne.s32.totalorder %s46, %s60
      %p62 = scmp.eq.s32.totalorder %s29, 0
      %p63 = por %p61, %p62
      %s65 = sadd.s32 %s64, 1
      %p68 = scmp.eq.s32.totalorder %s23, 3
      %p69 = scmp.ne.s32.totalorder %s64, %s66
      %p70 = scmp.eq.s32.totalorder %s23, 0
      %p71 = por %p69, %p70
      %p72 = scmp.ne.s32.totalorder %s64, %s66
      %p73 = scmp.eq.s32.totalorder %s28, 3
      %p74 = por %p72, %p73
      %p75 = scmp.ne.s32.totalorder %s66, %s67
      %p76 = scmp.eq.s32.totalorder %s28, 0
      %p77 = por %p75, %p76
      %p78 = scmp.ne.s32.totalorder %s66, %s67
      %p79 = scmp.eq.s32.totalorder %s29, 3
      %p80 = por %p78, %p79
      %p82 = scmp.ne.s32.totalorder %s67, %s81
      %p83 = scmp.eq.s32.totalorder %s29, 0
      %p84 = por %p82, %p83
      %s85 = ssub.s32 %s31, %s38
      %s86 = ssub.s32 %s30, %s42
      %s87 = sor.u32 %s85, %s86
      %p88 = scmp.eq.s32.totalorder %s87, 0
      %s90 = sadd.s32 %s89, 1
      %s91 = scalar_select %p88, %s89, %s90
      %p94 = pneg %p88
      %p95 = scmp.eq.s32.totalorder %s23, 3
      %p96 = por %p94, %p95
      %p97 = scmp.ne.s32.totalorder %s89, %s92
      %p98 = scmp.eq.s32.totalorder %s23, 0
      %p99 = por %p97, %p98
      %p100 = scmp.ne.s32.totalorder %s89, %s92
      %p101 = scmp.eq.s32.totalorder %s28, 3
      %p102 = por %p100, %p101
      %p103 = scmp.ne.s32.totalorder %s92, %s93
      %p104 = scmp.eq.s32.totalorder %s28, 0
      %p105 = por %p103, %p104
      %p106 = scmp.ne.s32.totalorder %s92, %s93
      %p107 = scmp.eq.s32.totalorder %s29, 3
      %p108 = por %p106, %p107
      %p110 = scmp.ne.s32.totalorder %s93, %s109
      %p111 = scmp.eq.s32.totalorder %s29, 0
      %p112 = por %p110, %p111
      %s113 = ssub.s32 %s31, %s38
      %s114 = ssub.s32 %s30, %s42
      %s115 = sor.u32 %s113, %s114
      %p116 = scmp.eq.s32.totalorder %s115, 0
      %s118 = sadd.s32 %s117, 1
      %s119 = scalar_select %p116, %s117, %s118
      %p122 = pneg %p116
      %p123 = scmp.eq.s32.totalorder %s23, 3
      %p124 = por %p122, %p123
      %p125 = scmp.ne.s32.totalorder %s117, %s120
      %p126 = scmp.eq.s32.totalorder %s23, 0
      %p127 = por %p125, %p126
      %p128 = scmp.ne.s32.totalorder %s117, %s120
      %p129 = scmp.eq.s32.totalorder %s28, 3
      %p130 = por %p128, %p129
      %p131 = scmp.ne.s32.totalorder %s120, %s121
      %p132 = scmp.eq.s32.totalorder %s28, 0
      %p133 = por %p131, %p132
      %p134 = scmp.ne.s32.totalorder %s120, %s121
      %p135 = scmp.eq.s32.totalorder %s29, 3
      %p136 = por %p134, %p135
      %p138 = scmp.ne.s32.totalorder %s121, %s137
      %p139 = scmp.eq.s32.totalorder %s29, 0
      %p140 = por %p138, %p139
      %s141 = ssub.s32 %s30, %s42
      %p142 = scmp.eq.s32.totalorder %s141, 0
      %s144 = sadd.s32 %s143, 1
      %s145 = scalar_select %p142, %s143, %s144
      %p148 = pneg %p142
      %p149 = scmp.eq.s32.totalorder %s23, 3
      %p150 = por %p148, %p149
      %p151 = scmp.ne.s32.totalorder %s143, %s146
      %p152 = scmp.eq.s32.totalorder %s23, 0
      %p153 = por %p151, %p152
      %p154 = scmp.ne.s32.totalorder %s143, %s146
      %p155 = scmp.eq.s32.totalorder %s28, 3
      %p156 = por %p154, %p155
      %p157 = scmp.ne.s32.totalorder %s146, %s147
      %p158 = scmp.eq.s32.totalorder %s28, 0
      %p159 = por %p157, %p158
      %p160 = scmp.ne.s32.totalorder %s146, %s147
      %p161 = scmp.eq.s32.totalorder %s29, 3
      %p162 = por %p160, %p161
      %p164 = scmp.ne.s32.totalorder %s147, %s163
      %p165 = scmp.eq.s32.totalorder %s29, 0
      %p166 = por %p164, %p165
      %s167 = ssub.s32 %s30, %s42
      %p168 = scmp.eq.s32.totalorder %s167, 0
      %s170 = sadd.s32 %s169, 1
      %s171 = scalar_select %p168, %s169, %s170
      %p174 = pneg %p168
      %p175 = scmp.eq.s32.totalorder %s23, 3
      %p176 = por %p174, %p175
      %p177 = scmp.ne.s32.totalorder %s169, %s172
      %p178 = scmp.eq.s32.totalorder %s23, 0
      %p179 = por %p177, %p178
      %p180 = scmp.ne.s32.totalorder %s169, %s172
      %p181 = scmp.eq.s32.totalorder %s28, 3
      %p182 = por %p180, %p181
      %p183 = scmp.ne.s32.totalorder %s172, %s173
      %p184 = scmp.eq.s32.totalorder %s28, 0
      %p185 = por %p183, %p184
      %p186 = scmp.ne.s32.totalorder %s172, %s173
      %p187 = scmp.eq.s32.totalorder %s29, 3
      %p188 = por %p186, %p187
      %p190 = scmp.ne.s32.totalorder %s173, %s189
      %p191 = scmp.eq.s32.totalorder %s29, 0
      %p192 = por %p190, %p191
      %s193 = ssub.s32 %s31, %s38
      %s194 = ssub.s32 %s30, %s42
      %s195 = sor.u32 %s193, %s194
      %p196 = scmp.eq.s32.totalorder %s195, 0
      %s198 = sadd.s32 %s197, 1
      %s199 = scalar_select %p196, %s197, %s198
      %p202 = pneg %p196
      %p203 = scmp.eq.s32.totalorder %s23, 3
      %p204 = por %p202, %p203
      %p205 = scmp.ne.s32.totalorder %s197, %s200
      %p206 = scmp.eq.s32.totalorder %s23, 0
      %p207 = por %p205, %p206
      %p208 = scmp.ne.s32.totalorder %s197, %s200
      %p209 = scmp.eq.s32.totalorder %s28, 3
      %p210 = por %p208, %p209
      %p211 = scmp.ne.s32.totalorder %s200, %s201
      %p212 = scmp.eq.s32.totalorder %s28, 0
      %p213 = por %p211, %p212
      %p214 = scmp.ne.s32.totalorder %s200, %s201
      %p215 = scmp.eq.s32.totalorder %s29, 3
      %p216 = por %p214, %p215
      %p218 = scmp.ne.s32.totalorder %s201, %s217
      %p219 = scmp.eq.s32.totalorder %s29, 0
      %p220 = por %p218, %p219
      %p221 = scmp.le.s32.totalorder 1, %s23
      %p222 = scmp.lt.s32.totalorder %s23, 5
      %p223 = pnand %p221, %p222
      %p224 = pneg %p223
      // Predicated region
      $region9: #{tpu_custom_call.1} parent=5 // pred_check
        _
      $region10: #{tpu_custom_call.1} parent=5 // pred_check_branch
        %226 = sbr.rel (%p223) target = $region12
      $region11: #{tpu_custom_call.1} parent=5 // pred_region
        %s227 = ssub.s32 %s23, 1
        // Predicated region
        $region13: #{tpu_custom_call.1} parent=11 // pred_check
          %p228 = pneg %p56
        $region14: #{tpu_custom_call.1} parent=11 // pred_check_branch
          %230 = sbr.rel (%p228) target = $region16
        $region15: #{tpu_custom_call.1} parent=11 // pred_region
          _
        $region16: #{tpu_custom_call.1} parent=11 // pred_fallthru
          _
        // Predicated region
        $region17: #{tpu_custom_call.1} parent=11 // pred_check
          %p231 = pneg %p77
        $region18: #{tpu_custom_call.1} parent=11 // pred_check_branch
          %233 = sbr.rel (%p231) target = $region20
        $region19: #{tpu_custom_call.1} parent=11 // pred_region
          _
        $region20: #{tpu_custom_call.1} parent=11 // pred_fallthru
          _
      $region12: #{tpu_custom_call.1} parent=5 // pred_fallthru
        _
      %p234 = scmp.lt.s32.totalorder %s23, 4
      // Predicated region
      $region21: #{tpu_custom_call.1} parent=5 // pred_check
        %p235 = pneg %p234
      $region22: #{tpu_custom_call.1} parent=5 // pred_check_branch
        %237 = sbr.rel (%p235) target = $region24
      $region23: #{tpu_custom_call.1} parent=5 // pred_region
        // Predicated region
        $region25: #{tpu_custom_call.1} parent=23 // pred_check
          %p238 = pneg %p99
        $region26: #{tpu_custom_call.1} parent=23 // pred_check_branch
          %240 = sbr.rel (%p238) target = $region28
        $region27: #{tpu_custom_call.1} parent=23 // pred_region
          %s241 = sand.u32 %s89, 1
          %s242 = sand.u32 %s89, 1
          %s243 = smul.addr %s242, 128
          %s244 = scalar_lea.vmem [#allocation4], %s243
          %s245 = smul.u32 16, %s31
          %s246 = smul.addr %s245, 2
          %s247 = sadd.s32 %s30, %s246
          %s248 = smul.addr %s247, 8
          %s249 = scalar_lea.vmem %s2, %s248
          // Predicated region
          $region29: #{tpu_custom_call.1} parent=27 // pred_check
            _
          $region30: #{tpu_custom_call.1} parent=27 // pred_check_branch
            %251 = sbr.rel (0) target = $region32
          $region31: #{tpu_custom_call.1} parent=27 // pred_region
            // Predicated region
            $region33: #{tpu_custom_call.1} parent=31 // pred_check
              _
            $region34: #{tpu_custom_call.1} parent=31 // pred_check_branch
              %253 = sbr.rel (0) target = $region36
            $region35: #{tpu_custom_call.1} parent=31 // pred_region
              // Predicated region
              $region48: #{tpu_custom_call.1} parent=35 // pred_check
                _
              $region49: #{tpu_custom_call.1} parent=35 // pred_check_branch
                %298 = sbr.rel (0) target = $region51
              $region50: #{tpu_custom_call.1} parent=35 // pred_region
                loop: start=0, step=1, limit=1
                $region52: #{tpu_custom_call.1} parent=50 // loop_pre_header
                  _
                $region53: #{tpu_custom_call.1} parent=50 // loop_header
                  %s300 = sphi 0, %s304
                  %p301 = scmp.ge.s32.totalorder %s300, 1
                  %s305 = sphi %s249, %s249
                  %s306 = sphi %s244, %s244
                $region54: #{tpu_custom_call.1} parent=50 // loop_header_branch
                  %303 = sbr.rel (%p301) target = $region58
                $region55: #{tpu_custom_call.1} parent=50 // loop_body
                  %v307 = vld [vmem:[%s305] sm:$0xff]
                  %308 = vst [vmem:[%s306] sm:$0xff] %v307
                  %v309 = vld [vmem:[%s305 + $0x10] sm:$0xff]
                  %310 = vst [vmem:[%s306 + $0x8] sm:$0xff] %v309
                  %v311 = vld [vmem:[%s305 + $0x20] sm:$0xff]
                  %312 = vst [vmem:[%s306 + $0x10] sm:$0xff] %v311
                  %v313 = vld [vmem:[%s305 + $0x30] sm:$0xff]
                  %314 = vst [vmem:[%s306 + $0x18] sm:$0xff] %v313
                  %v315 = vld [vmem:[%s305 + $0x40] sm:$0xff]
                  %316 = vst [vmem:[%s306 + $0x20] sm:$0xff] %v315
                  %v317 = vld [vmem:[%s305 + $0x50] sm:$0xff]
                  %318 = vst [vmem:[%s306 + $0x28] sm:$0xff] %v317
                  %v319 = vld [vmem:[%s305 + $0x60] sm:$0xff]
                  %320 = vst [vmem:[%s306 + $0x30] sm:$0xff] %v319
                  %v321 = vld [vmem:[%s305 + $0x70] sm:$0xff]
                  %322 = vst [vmem:[%s306 + $0x38] sm:$0xff] %v321
                  %v323 = vld [vmem:[%s305 + $0x80] sm:$0xff]
                  %324 = vst [vmem:[%s306 + $0x40] sm:$0xff] %v323
                  %v325 = vld [vmem:[%s305 + $0x90] sm:$0xff]
                  %326 = vst [vmem:[%s306 + $0x48] sm:$0xff] %v325
                  %v327 = vld [vmem:[%s305 + $0xa0] sm:$0xff]
                  %328 = vst [vmem:[%s306 + $0x50] sm:$0xff] %v327
                  %v329 = vld [vmem:[%s305 + $0xb0] sm:$0xff]
                  %330 = vst [vmem:[%s306 + $0x58] sm:$0xff] %v329
                  %v331 = vld [vmem:[%s305 + $0xc0] sm:$0xff]
                  %332 = vst [vmem:[%s306 + $0x60] sm:$0xff] %v331
                  %v333 = vld [vmem:[%s305 + $0xd0] sm:$0xff]
                  %334 = vst [vmem:[%s306 + $0x68] sm:$0xff] %v333
                  %v335 = vld [vmem:[%s305 + $0xe0] sm:$0xff]
                  %336 = vst [vmem:[%s306 + $0x70] sm:$0xff] %v335
                  %v337 = vld [vmem:[%s305 + $0xf0] sm:$0xff]
                  %338 = vst [vmem:[%s306 + $0x78] sm:$0xff] %v337
                $region56: #{tpu_custom_call.1} parent=50 // loop_footer
                  %s304 = sadd.s32 1, %s300
                $region57: #{tpu_custom_call.1} parent=50 // loop_footer_branch
                  %299 = sbr.rel target = $region53
                $region58: #{tpu_custom_call.1} parent=50 // loop_exit
                  _
              $region51: #{tpu_custom_call.1} parent=35 // pred_fallthru
                _
              // Predicated region
              $region59: #{tpu_custom_call.1} parent=35 // pred_check
                _
              $region60: #{tpu_custom_call.1} parent=35 // pred_check_branch
                %340 = sbr.rel target = $region62
              $region61: #{tpu_custom_call.1} parent=35 // pred_region
                _
              $region62: #{tpu_custom_call.1} parent=35 // pred_fallthru
                _
            $region36: #{tpu_custom_call.1} parent=31 // pred_fallthru
              _
            // Predicated region
            $region37: #{tpu_custom_call.1} parent=31 // pred_check
              _
            $region38: #{tpu_custom_call.1} parent=31 // pred_check_branch
              %255 = sbr.rel target = $region40
            $region39: #{tpu_custom_call.1} parent=31 // pred_region
              loop: start=0, step=1, limit=1
              $region41: #{tpu_custom_call.1} parent=39 // loop_pre_header
                _
              $region42: #{tpu_custom_call.1} parent=39 // loop_header
                %s258 = sphi 0, %s262
                %p259 = scmp.ge.s32.totalorder %s258, 1
                %s263 = sphi %s249, %s249
                %s264 = sphi %s244, %s244
              $region43: #{tpu_custom_call.1} parent=39 // loop_header_branch
                %261 = sbr.rel (%p259) target = $region47
              $region44: #{tpu_custom_call.1} parent=39 // loop_body
                %v265 = vld [vmem:[%s263] sm:$0xff]
                %266 = vst [vmem:[%s264] sm:$0xff] %v265
                %v267 = vld [vmem:[%s263 + $0x10] sm:$0xff]
                %268 = vst [vmem:[%s264 + $0x8] sm:$0xff] %v267
                %v269 = vld [vmem:[%s263 + $0x20] sm:$0xff]
                %270 = vst [vmem:[%s264 + $0x10] sm:$0xff] %v269
                %v271 = vld [vmem:[%s263 + $0x30] sm:$0xff]
                %272 = vst [vmem:[%s264 + $0x18] sm:$0xff] %v271
                %v273 = vld [vmem:[%s263 + $0x40] sm:$0xff]
                %274 = vst [vmem:[%s264 + $0x20] sm:$0xff] %v273
                %v275 = vld [vmem:[%s263 + $0x50] sm:$0xff]
                %276 = vst [vmem:[%s264 + $0x28] sm:$0xff] %v275
                %v277 = vld [vmem:[%s263 + $0x60] sm:$0xff]
                %278 = vst [vmem:[%s264 + $0x30] sm:$0xff] %v277
                %v279 = vld [vmem:[%s263 + $0x70] sm:$0xff]
                %280 = vst [vmem:[%s264 + $0x38] sm:$0xff] %v279
                %v281 = vld [vmem:[%s263 + $0x80] sm:$0xff]
                %282 = vst [vmem:[%s264 + $0x40] sm:$0xff] %v281
                %v283 = vld [vmem:[%s263 + $0x90] sm:$0xff]
                %284 = vst [vmem:[%s264 + $0x48] sm:$0xff] %v283
                %v285 = vld [vmem:[%s263 + $0xa0] sm:$0xff]
                %286 = vst [vmem:[%s264 + $0x50] sm:$0xff] %v285
                %v287 = vld [vmem:[%s263 + $0xb0] sm:$0xff]
                %288 = vst [vmem:[%s264 + $0x58] sm:$0xff] %v287
                %v289 = vld [vmem:[%s263 + $0xc0] sm:$0xff]
                %290 = vst [vmem:[%s264 + $0x60] sm:$0xff] %v289
                %v291 = vld [vmem:[%s263 + $0xd0] sm:$0xff]
                %292 = vst [vmem:[%s264 + $0x68] sm:$0xff] %v291
                %v293 = vld [vmem:[%s263 + $0xe0] sm:$0xff]
                %294 = vst [vmem:[%s264 + $0x70] sm:$0xff] %v293
                %v295 = vld [vmem:[%s263 + $0xf0] sm:$0xff]
                %296 = vst [vmem:[%s264 + $0x78] sm:$0xff] %v295
              $region45: #{tpu_custom_call.1} parent=39 // loop_footer
                %s262 = sadd.s32 1, %s258
              $region46: #{tpu_custom_call.1} parent=39 // loop_footer_branch
                %257 = sbr.rel target = $region42
              $region47: #{tpu_custom_call.1} parent=39 // loop_exit
                _
            $region40: #{tpu_custom_call.1} parent=31 // pred_fallthru
              _
          $region32: #{tpu_custom_call.1} parent=27 // pred_fallthru
            _
          %341 = vnop
        $region28: #{tpu_custom_call.1} parent=23 // pred_fallthru
          _
        // Predicated region
        $region63: #{tpu_custom_call.1} parent=23 // pred_check
          %p342 = pneg %p127
        $region64: #{tpu_custom_call.1} parent=23 // pred_check_branch
          %344 = sbr.rel (%p342) target = $region66
        $region65: #{tpu_custom_call.1} parent=23 // pred_region
          %s345 = sand.u32 %s117, 1
          %s346 = scalar_lea.sflag [#allocation6], %s345
          %s347 = sand.u32 %s117, 1
          %s348 = smul.addr %s347, 128
          %s349 = scalar_lea.vmem [#allocation5], %s348
          %s350 = smul.u32 16, %s31
          %s352 = ssub.s32 2048, 2048
          %353 = vsyncadd %s346, %s352
          %s354 = smul.addr %s350, 2
          %s355 = sadd.s32 %s30, %s354
          %s356 = smul.addr %s355, 128
          %s357 = scalar_lea.hbm %s3, %s356
          %s358 = sshll.u32 %s349, 4
          %s359 = int_to_ptr.vmem [resolvable:$true] %s358
          %364 = dma.hbm_to_vmem [thread:$0]  %s357, 2048, %s359, %s346, 256, 128, 8
        $region66: #{tpu_custom_call.1} parent=23 // pred_fallthru
          _
        // Predicated region
        $region67: #{tpu_custom_call.1} parent=23 // pred_check
          %p365 = pneg %p153
        $region68: #{tpu_custom_call.1} parent=23 // pred_check_branch
          %367 = sbr.rel (%p365) target = $region70
        $region69: #{tpu_custom_call.1} parent=23 // pred_region
          %p368 = scmp.lt.s32.totalorder %s30, 1
          %s369 = scalar_select %p368, %s30, 1
          %s370 = smul.addr %s369, 8
          %s371 = scalar_lea.vmem %s4, %s370
        $region70: #{tpu_custom_call.1} parent=23 // pred_fallthru
          _
      $region24: #{tpu_custom_call.1} parent=5 // pred_fallthru
        _
      %p372 = scmp.le.s32.totalorder 1, %s23
      %p373 = scmp.lt.s32.totalorder %s23, 5
      %p374 = pnand %p372, %p373
      %p375 = pneg %p374
      // Predicated region
      $region71: #{tpu_custom_call.1} parent=5 // pred_check
        _
      $region72: #{tpu_custom_call.1} parent=5 // pred_check_branch
        %377 = sbr.rel (%p374) target = $region74
      $region73: #{tpu_custom_call.1} parent=5 // pred_region
        %s378 = ssub.s32 %s23, 1
        %s379 = sand.u32 %s92, 1
        %s380 = sand.u32 %s92, 1
        %s381 = smul.addr %s380, 128
        %s382 = scalar_lea.vmem [#allocation4], %s381
        // Predicated region
        $region75: #{tpu_custom_call.1} parent=73 // pred_check
          %p383 = pneg %p105
        $region76: #{tpu_custom_call.1} parent=73 // pred_check_branch
          %385 = sbr.rel (%p383) target = $region78
        $region77: #{tpu_custom_call.1} parent=73 // pred_region
          _
        $region78: #{tpu_custom_call.1} parent=73 // pred_fallthru
          _
        %s386 = sand.u32 %s120, 1
        %s387 = scalar_lea.sflag [#allocation6], %s386
        %s388 = sand.u32 %s120, 1
        %s389 = smul.addr %s388, 128
        %s390 = scalar_lea.vmem [#allocation5], %s389
        // Predicated region
        $region79: #{tpu_custom_call.1} parent=73 // pred_check
          %p391 = pneg %p133
        $region80: #{tpu_custom_call.1} parent=73 // pred_check_branch
          %393 = sbr.rel (%p391) target = $region82
        $region81: #{tpu_custom_call.1} parent=73 // pred_region
          %394 = dma.done %s387, 2048
        $region82: #{tpu_custom_call.1} parent=73 // pred_fallthru
          _
        %p395 = pneg %p56
        %p396 = pneg %p53
        %p397 = pneg %p77
        %p398 = pneg %p74
        %s399 = sand.u32 %s92, 1
        %s400 = sand.u32 %s92, 1
        %s401 = smul.addr %s400, 128
        %s402 = scalar_lea.vmem [#allocation4], %s401
        %p403 = pneg %p105
        %p404 = pneg %p102
        %s405 = sand.u32 %s120, 1
        %s406 = scalar_lea.sflag [#allocation6], %s405
        %s407 = sand.u32 %s120, 1
        %s408 = smul.addr %s407, 128
        %s409 = scalar_lea.vmem [#allocation5], %s408
        %p410 = pneg %p133
        %p411 = pneg %p130
        %p412 = scmp.lt.s32.totalorder %s32, 1
        %s413 = scalar_select %p412, %s32, 1
        %s414 = smul.addr %s413, 8
        %s415 = scalar_lea.vmem %s4, %s414
        %p416 = pneg %p159
        %p417 = pneg %p156
        %p418 = pneg %p185
        %p419 = pneg %p182
        %s420 = sand.u32 %s172, 1
        %s421 = scalar_lea.sflag [#allocation7], %s420
        %s422 = sand.u32 %s172, 1
        %s423 = smul.addr %s422, 8
        %s424 = scalar_lea.vmem [#allocation8], %s423
        %p425 = pneg %p213
        %p426 = pneg %p210
        %s427 = sand.u32 %s200, 1
        %s428 = scalar_lea.sflag [#allocation10], %s427
        %s429 = sand.u32 %s200, 1
        %s430 = smul.addr %s429, 128
        %s431 = scalar_lea.vmem [#allocation9], %s430
        %s432 = smul.u32 16, %s33
        %s433 = smul.u32 16, %s33
        %p434 = scmp.lt.s32.totalorder %s32, 1
        %s435 = scalar_select %p434, %s32, 1
        %s436 = smul.addr %s435, 8
        %s437 = scalar_lea.vmem %s4, %s436
        %s438 = smul.u32 16, %s33
        %s439 = sld [smem:[#allocation3]]
        %p440 = scmp.eq.s32.totalorder %s33, 0
        // Predicated region
        $region83: #{tpu_custom_call.1} parent=73 // pred_check
          %p441 = pneg %p440
        $region84: #{tpu_custom_call.1} parent=73 // pred_check_branch
          %443 = sbr.rel (%p441) target = $region86
        $region85: #{tpu_custom_call.1} parent=73 // pred_region
          %444 = vst [vmem:[#allocation2] sm:$0xff] 0.0
        $region86: #{tpu_custom_call.1} parent=73 // pred_fallthru
          _
        %v445 = vld [vmem:[%s390] sm:$0xff]
        %v446 = vld [vmem:[%s390 + $0x8] sm:$0xff]
        %v447 = vld [vmem:[%s390 + $0x10] sm:$0xff]
        %v448 = vld [vmem:[%s390 + $0x18] sm:$0xff]
        %v449 = vld [vmem:[%s390 + $0x20] sm:$0xff]
        %v450 = vld [vmem:[%s390 + $0x28] sm:$0xff]
        %v451 = vld [vmem:[%s390 + $0x30] sm:$0xff]
        %v452 = vld [vmem:[%s390 + $0x38] sm:$0xff]
        %v453 = vld [vmem:[%s390 + $0x40] sm:$0xff]
        %v454 = vld [vmem:[%s390 + $0x48] sm:$0xff]
        %v455 = vld [vmem:[%s390 + $0x50] sm:$0xff]
        %v456 = vld [vmem:[%s390 + $0x58] sm:$0xff]
        %v457 = vld [vmem:[%s390 + $0x60] sm:$0xff]
        %v458 = vld [vmem:[%s390 + $0x68] sm:$0xff]
        %v459 = vld [vmem:[%s390 + $0x70] sm:$0xff]
        %v460 = vld [vmem:[%s390 + $0x78] sm:$0xff]
        %v461 = vld [vmem:[%s382] sm:$0xff]
        %v462 = vld [vmem:[%s382 + $0x8] sm:$0xff]
        %v463 = vld [vmem:[%s382 + $0x10] sm:$0xff]
        %v464 = vld [vmem:[%s382 + $0x18] sm:$0xff]
        %v465 = vld [vmem:[%s382 + $0x20] sm:$0xff]
        %v466 = vld [vmem:[%s382 + $0x28] sm:$0xff]
        %v467 = vld [vmem:[%s382 + $0x30] sm:$0xff]
        %v468 = vld [vmem:[%s382 + $0x38] sm:$0xff]
        %v469 = vld [vmem:[%s382 + $0x40] sm:$0xff]
        %v470 = vld [vmem:[%s382 + $0x48] sm:$0xff]
        %v471 = vld [vmem:[%s382 + $0x50] sm:$0xff]
        %v472 = vld [vmem:[%s382 + $0x58] sm:$0xff]
        %v473 = vld [vmem:[%s382 + $0x60] sm:$0xff]
        %v474 = vld [vmem:[%s382 + $0x68] sm:$0xff]
        %v475 = vld [vmem:[%s382 + $0x70] sm:$0xff]
        %v476 = vld [vmem:[%s382 + $0x78] sm:$0xff]
        %v477 = vsub.f32 %v461, %v445
        %v478 = vsub.f32 %v462, %v446
        %v479 = vsub.f32 %v463, %v447
        %v480 = vsub.f32 %v464, %v448
        %v481 = vsub.f32 %v465, %v449
        %v482 = vsub.f32 %v466, %v450
        %v483 = vsub.f32 %v467, %v451
        %v484 = vsub.f32 %v468, %v452
        %v485 = vsub.f32 %v469, %v453
        %v486 = vsub.f32 %v470, %v454
        %v487 = vsub.f32 %v471, %v455
        %v488 = vsub.f32 %v472, %v456
        %v489 = vsub.f32 %v473, %v457
        %v490 = vsub.f32 %v474, %v458
        %v491 = vsub.f32 %v475, %v459
        %v492 = vsub.f32 %v476, %v460
        %v493 = vstv %s439
        %v494 = vmul.f32 %v493, %v477
        %v495 = vmul.f32 %v493, %v478
        %v496 = vmul.f32 %v493, %v479
        %v497 = vmul.f32 %v493, %v480
        %v498 = vmul.f32 %v493, %v481
        %v499 = vmul.f32 %v493, %v482
        %v500 = vmul.f32 %v493, %v483
        %v501 = vmul.f32 %v493, %v484
        %v502 = vmul.f32 %v493, %v485
        %v503 = vmul.f32 %v493, %v486
        %v504 = vmul.f32 %v493, %v487
        %v505 = vmul.f32 %v493, %v488
        %v506 = vmul.f32 %v493, %v489
        %v507 = vmul.f32 %v493, %v490
        %v508 = vmul.f32 %v493, %v491
        %v509 = vmul.f32 %v493, %v492
        %v510 = vadd.f32 %v445, %v494
        %v511 = vadd.f32 %v446, %v495
        %v512 = vadd.f32 %v447, %v496
        %v513 = vadd.f32 %v448, %v497
        %v514 = vadd.f32 %v449, %v498
        %v515 = vadd.f32 %v450, %v499
        %v516 = vadd.f32 %v451, %v500
        %v517 = vadd.f32 %v452, %v501
        %v518 = vadd.f32 %v453, %v502
        %v519 = vadd.f32 %v454, %v503
        %v520 = vadd.f32 %v455, %v504
        %v521 = vadd.f32 %v456, %v505
        %v522 = vadd.f32 %v457, %v506
        %v523 = vadd.f32 %v458, %v507
        %v524 = vadd.f32 %v459, %v508
        %v525 = vadd.f32 %v460, %v509
        %526 = vst [vmem:[%s431] sm:$0xff] %v510
        %527 = vst [vmem:[%s431 + $0x8] sm:$0xff] %v511
        %528 = vst [vmem:[%s431 + $0x10] sm:$0xff] %v512
        %529 = vst [vmem:[%s431 + $0x18] sm:$0xff] %v513
        %530 = vst [vmem:[%s431 + $0x20] sm:$0xff] %v514
        %531 = vst [vmem:[%s431 + $0x28] sm:$0xff] %v515
        %532 = vst [vmem:[%s431 + $0x30] sm:$0xff] %v516
        %533 = vst [vmem:[%s431 + $0x38] sm:$0xff] %v517
        %534 = vst [vmem:[%s431 + $0x40] sm:$0xff] %v518
        %535 = vst [vmem:[%s431 + $0x48] sm:$0xff] %v519
        %536 = vst [vmem:[%s431 + $0x50] sm:$0xff] %v520
        %537 = vst [vmem:[%s431 + $0x58] sm:$0xff] %v521
        %538 = vst [vmem:[%s431 + $0x60] sm:$0xff] %v522
        %539 = vst [vmem:[%s431 + $0x68] sm:$0xff] %v523
        %540 = vst [vmem:[%s431 + $0x70] sm:$0xff] %v524
        %541 = vst [vmem:[%s431 + $0x78] sm:$0xff] %v525
        %s542 = smul.u32 %s33, 128
        %s543 = sshra.s32 %s542, 7
        %s544 = sand.u32 %s542, 127
        %s545 = smul.addr %s543, 8
        %s546 = scalar_lea.vmem %s1, %s545
        %v547 = vld [vmem:[%s546] sm:$0xff]
        %v548 = vld [vmem:[#allocation2] sm:$0xff]
        %549 = vmatprep.subr.mxu0 0.0
        %550 = vmatpush1.msra.mxu0 %v510
        %551 = vmatprep.subr.mxu0 0.0
        %552 = vmatpush1.msra.mxu0 %v511
        %553 = vmatprep.subr.mxu0 0.0
        %554 = vmatpush1.msra.mxu0 %v512
        %555 = vmatprep.subr.mxu0 0.0
        %556 = vmatpush1.msra.mxu0 %v513
        %557 = vmatprep.subr.mxu0 0.0
        %558 = vmatpush1.msra.mxu0 %v514
        %559 = vmatprep.subr.mxu0 0.0
        %560 = vmatpush1.msra.mxu0 %v515
        %561 = vmatprep.subr.mxu0 0.0
        %562 = vmatpush1.msra.mxu0 %v516
        %563 = vmatprep.subr.mxu0 0.0
        %564 = vmatpush1.msra.mxu0 %v517
        %565 = vmatprep.subr.mxu0 0.0
        %566 = vmatpush1.msra.mxu0 %v518
        %567 = vmatprep.subr.mxu0 0.0
        %568 = vmatpush1.msra.mxu0 %v519
        %569 = vmatprep.subr.mxu0 0.0
        %570 = vmatpush1.msra.mxu0 %v520
        %571 = vmatprep.subr.mxu0 0.0
        %572 = vmatpush1.msra.mxu0 %v521
        %573 = vmatprep.subr.mxu0 0.0
        %574 = vmatpush1.msra.mxu0 %v522
        %575 = vmatprep.subr.mxu0 0.0
        %576 = vmatpush1.msra.mxu0 %v523
        %577 = vmatprep.subr.mxu0 0.0
        %578 = vmatpush1.msra.mxu0 %v524
        %579 = vmatprep.subr.mxu0 0.0
        %580 = vmatpush1.msra.mxu0 %v525
        %581 = vmatprep.subr.mxu0 0.0
        %582 = vmatpush1.msra.mxu0 0.0
        %583 = vmatprep.subr.mxu0 0.0
        %584 = vmatpush1.msra.mxu0 0.0
        %585 = vmatprep.subr.mxu0 0.0
        %586 = vmatpush1.msra.mxu0 0.0
        %587 = vmatprep.subr.mxu0 0.0
        %588 = vmatpush1.msra.mxu0 0.0
        %589 = vmatprep.subr.mxu0 0.0
        %590 = vmatpush1.msra.mxu0 0.0
        %591 = vmatprep.subr.mxu0 0.0
        %592 = vmatpush1.msra.mxu0 0.0
        %593 = vmatprep.subr.mxu0 0.0
        %594 = vmatpush1.msra.mxu0 0.0
        %595 = vmatprep.subr.mxu0 0.0
        %596 = vmatpush1.msra.mxu0 0.0
        %597 = vmatprep.subr.mxu0 0.0
        %598 = vmatpush1.msra.mxu0 0.0
        %599 = vmatprep.subr.mxu0 0.0
        %600 = vmatpush1.msra.mxu0 0.0
        %601 = vmatprep.subr.mxu0 0.0
        %602 = vmatpush1.msra.mxu0 0.0
        %603 = vmatprep.subr.mxu0 0.0
        %604 = vmatpush1.msra.mxu0 0.0
        %605 = vmatprep.subr.mxu0 0.0
        %606 = vmatpush1.msra.mxu0 0.0
        %607 = vmatprep.subr.mxu0 0.0
        %608 = vmatpush1.msra.mxu0 0.0
        %609 = vmatprep.subr.mxu0 0.0
        %610 = vmatpush1.msra.mxu0 0.0
        %611 = vmatprep.subr.mxu0 0.0
        %612 = vmatpush1.msra.mxu0 0.0
        %613 = vmatprep.mubr.f32.mxu0 0.0
        %614 = vmatmul.mubr.f32.gmra.mrb[0].mxu0 %v547
        %v615 = vpop.f32.mrb[0].mxu0
        %v616 = vadd.f32 0.0, %v615
        %v617 = vpop.f32.mrb[0].mxu0
        %618 = vdwg.mxu0
        %v619 = vadd.f32 %v548, %v616
        %620 = vst [vmem:[#allocation2] sm:$0xff] %v619
        %p621 = scmp.eq.s32.totalorder %s33, 1
        // Predicated region
        $region87: #{tpu_custom_call.1} parent=73 // pred_check
          %p622 = pneg %p621
        $region88: #{tpu_custom_call.1} parent=73 // pred_check_branch
          %624 = sbr.rel (%p622) target = $region90
        $region89: #{tpu_custom_call.1} parent=73 // pred_region
          %v625 = vld [vmem:[#allocation2] sm:$0xff]
          %v626 = vld [vmem:[%s437] sm:$0xff]
          %v627 = vsub.f32 %v625, %v626
          %v628 = vmul.f32 %v627, %v627
          %629 = vadd.xlane.f32.xlu0 %v628
          %v630 = vpop.xlane.xlu0 %629
          %v631 = vrot.slane %v630, 4
          %v632 = vadd.f32 %v630, %v631
          %v633 = vrot.slane %v632, 2
          %v634 = vadd.f32 %v632, %v633
          %v635 = vrot.slane %v634, 1
          %v636 = vadd.f32 %v634, %v635
          %s637 = vtos %v636
          %v638 = vstv %s637
          %639 = vst [vmem:[%s424] sm:$0xff] %v638
        $region90: #{tpu_custom_call.1} parent=73 // pred_fallthru
          _
        %s640 = sand.u32 %s172, 1
        %s641 = scalar_lea.sflag [#allocation7], %s640
        %s642 = sand.u32 %s172, 1
        %s643 = smul.addr %s642, 8
        %s644 = scalar_lea.vmem [#allocation8], %s643
        %s645 = sand.u32 %s200, 1
        %s646 = scalar_lea.sflag [#allocation10], %s645
        %s647 = sand.u32 %s200, 1
        %s648 = smul.addr %s647, 128
        %s649 = scalar_lea.vmem [#allocation9], %s648
        // Predicated region
        $region91: #{tpu_custom_call.1} parent=73 // pred_check
          %p650 = pneg %p182
        $region92: #{tpu_custom_call.1} parent=73 // pred_check_branch
          %652 = sbr.rel (%p650) target = $region94
        $region93: #{tpu_custom_call.1} parent=73 // pred_region
          %s654 = ssub.s32 128, 128
          %655 = vsyncadd %s641, %s654
          %s656 = smul.addr %s32, 128
          %s657 = scalar_lea.hbm %s5, %s656
          %s659 = sshll.u32 %s644, 4
          %s660 = int_to_ptr.vmem [resolvable:$true] %s659
          %662 = dma.vmem_to_hbm [thread:$0]  %s660, 128, %s657, %s641
        $region94: #{tpu_custom_call.1} parent=73 // pred_fallthru
          _
        // Predicated region
        $region95: #{tpu_custom_call.1} parent=73 // pred_check
          %p663 = pneg %p210
        $region96: #{tpu_custom_call.1} parent=73 // pred_check_branch
          %665 = sbr.rel (%p663) target = $region98
        $region97: #{tpu_custom_call.1} parent=73 // pred_region
          %s666 = smul.u32 16, %s33
          %s668 = ssub.s32 2048, 2048
          %669 = vsyncadd %s646, %s668
          %s670 = smul.addr %s666, 2
          %s671 = sadd.s32 %s32, %s670
          %s672 = smul.addr %s671, 128
          %s673 = scalar_lea.hbm %s6, %s672
          %s674 = sshll.u32 %s649, 4
          %s675 = int_to_ptr.vmem [resolvable:$true] %s674
          %680 = dma.vmem_to_hbm [thread:$0]  %s675, 2048, %s673, %s646, 128, 256, 8
        $region98: #{tpu_custom_call.1} parent=73 // pred_fallthru
          _
      $region74: #{tpu_custom_call.1} parent=5 // pred_fallthru
        _
      %p681 = scmp.le.s32.totalorder 2, %s23
      // Predicated region
      $region99: #{tpu_custom_call.1} parent=5 // pred_check
        %p682 = pneg %p681
      $region100: #{tpu_custom_call.1} parent=5 // pred_check_branch
        %684 = sbr.rel (%p682) target = $region102
      $region101: #{tpu_custom_call.1} parent=5 // pred_region
        %s685 = ssub.s32 %s23, 2
        // Predicated region
        $region103: #{tpu_custom_call.1} parent=101 // pred_check
          %p686 = pneg %p188
        $region104: #{tpu_custom_call.1} parent=101 // pred_check_branch
          %688 = sbr.rel (%p686) target = $region106
        $region105: #{tpu_custom_call.1} parent=101 // pred_region
          %s689 = sand.u32 %s173, 1
          %s690 = scalar_lea.sflag [#allocation7], %s689
          %s691 = sand.u32 %s173, 1
          %s692 = smul.addr %s691, 8
          %s693 = scalar_lea.vmem [#allocation8], %s692
          %694 = dma.done %s690, 128
        $region106: #{tpu_custom_call.1} parent=101 // pred_fallthru
          _
        // Predicated region
        $region107: #{tpu_custom_call.1} parent=101 // pred_check
          %p695 = pneg %p216
        $region108: #{tpu_custom_call.1} parent=101 // pred_check_branch
          %697 = sbr.rel (%p695) target = $region110
        $region109: #{tpu_custom_call.1} parent=101 // pred_region
          %s698 = sand.u32 %s201, 1
          %s699 = scalar_lea.sflag [#allocation10], %s698
          %s700 = sand.u32 %s201, 1
          %s701 = smul.addr %s700, 128
          %s702 = scalar_lea.vmem [#allocation9], %s701
          %703 = dma.done %s699, 2048
        $region110: #{tpu_custom_call.1} parent=101 // pred_fallthru
          _
      $region102: #{tpu_custom_call.1} parent=5 // pred_fallthru
        _
    $region6: #{tpu_custom_call.1} parent=1 // loop_footer
      %s27 = sadd.s32 1, %s23
    $region7: #{tpu_custom_call.1} parent=1 // loop_footer_branch
      %22 = sbr.rel target = $region3
    $region8: #{tpu_custom_call.1} parent=1 // loop_exit
      _
    %704 = vsyncpa [#allocation6], 1
    %s705 = scalar_lea.sflag [#allocation6], 1
    %706 = vsyncpa %s705, 1
    %707 = vsyncpa [#allocation7], 1
    %s708 = scalar_lea.sflag [#allocation7], 1
    %709 = vsyncpa %s708, 1
    %710 = vsyncpa [#allocation10], 1
    %s711 = scalar_lea.sflag [#allocation10], 1
    %712 = vsyncpa %s711, 1

</llo_original>
